<compile_context>
chip_gen: v5e
topology: v5e:2x2
jax: 0.10.0
libtpu: 0.0.40
codegen_flags: <defaults>
</compile_context>

<pallas_src>
import math
import functools

import jax
import jax.numpy as jnp
from jax.experimental import pallas as pl
from jax.experimental.pallas import tpu as pltpu


def _round_up(n: int, m: int) -> int:
    return ((n + m - 1) // m) * m


def _mlp_kernel(x_ref, w1_ref, b_ref, w2_ref, w3_ref, o_ref, *, h1_p, h2_p):
    """Fused forward: (Linear -> ReLU) x 2 -> Linear on one batch tile.

    Matmuls run in the weight dtype (bf16 fast path) with f32 accumulation;
    bias-add and ReLU happen in f32; activations are cast back to the weight
    dtype before feeding the next MXU op.  Biases live concatenated in b_ref
    as [1, h1_p + h2_p + latent_p]; slices are static and lane-aligned.
    """
    w_dtype = w1_ref.dtype

    x = x_ref[...]
    if x.dtype != w_dtype:
        x = x.astype(w_dtype)

    b1 = b_ref[:, :h1_p].astype(jnp.float32)
    b2 = b_ref[:, h1_p:h1_p + h2_p].astype(jnp.float32)
    b3 = b_ref[:, h1_p + h2_p:].astype(jnp.float32)

    # Hidden layer 1
    h = jnp.dot(x, w1_ref[...], preferred_element_type=jnp.float32)
    h = jnp.maximum(h + b1, 0.0).astype(w_dtype)

    # Hidden layer 2
    h = jnp.dot(h, w2_ref[...], preferred_element_type=jnp.float32)
    h = jnp.maximum(h + b2, 0.0).astype(w_dtype)

    # Final projection to (padded) latent_dim, no activation
    out = jnp.dot(h, w3_ref[...], preferred_element_type=jnp.float32) + b3
    o_ref[...] = out.astype(o_ref.dtype)

    # TODO(synk): dropout / batchnorm branches of the PyTorch module are not
    # exercised here (defaults dropout=0.0, use_batchnorm=False); dropout at
    # inference is identity anyway.


def prepare_params(params, *, dtype=None, lane_pad=128):
    """Pad weights/biases to lane-dense fan-out dims ONCE (outside forward).

    Returns a dict of arrays only:
      w1 [in, h1_p], w2 [h1_p, h2_p], w3 [h2_p, latent_p],
      b  [1, h1_p + h2_p + latent_p]  (b1|b2|b3 concatenated).
    Pass dtype=jnp.bfloat16 to get a bf16-compute path with f32 master params.
    """
    w1, b1 = params["w1"], params["b1"]
    w2, b2 = params["w2"], params["b2"]
    w3, b3 = params["w3"], params["b3"]
    h1, h2, latent = w1.shape[1], w2.shape[1], w3.shape[1]
    h1_p = _round_up(h1, lane_pad)
    h2_p = _round_up(h2, lane_pad)
    lat_p = _round_up(latent, lane_pad)

    if dtype is not None:
        w1, b1, w2, b2, w3, b3 = (a.astype(dtype) for a in (w1, b1, w2, b2, w3, b3))

    w1p = jnp.pad(w1, ((0, 0), (0, h1_p - h1)))
    w2p = jnp.pad(w2, ((0, h1_p - h1), (0, h2_p - h2)))
    w3p = jnp.pad(w3, ((0, h2_p - h2), (0, lat_p - latent)))
    b = jnp.concatenate(
        [jnp.pad(b1, ((0, 0), (0, h1_p - h1))),
         jnp.pad(b2, ((0, 0), (0, h2_p - h2))),
         jnp.pad(b3, ((0, 0), (0, lat_p - latent)))], axis=1)
    return {"w1": w1p, "w2": w2p, "w3": w3p, "b": b}


@functools.partial(jax.jit, static_argnames=("latent_dim", "batch_tile"))
def svdd_backbone_forward(x, prepared, *, latent_dim, batch_tile=512):
    """Run the fused SVDD backbone MLP via a single pallas_call.

    x: [B, in_dim]; prepared: output of prepare_params; latent_dim: true
    (unpadded) output dimension.
    """
    B, in_dim = x.shape
    h1_p = prepared["w1"].shape[1]
    h2_p = prepared["w2"].shape[1]
    lat_p = prepared["w3"].shape[1]

    # Batch tile: big for MXU utilization, >= 2 grid steps for mid/large B so
    # v7x's two TensorCores both get work on the "parallel" axis; no padding
    # of x — Pallas handles the ragged trailing block with masked DMA.
    if B <= 64:
        bt = _round_up(B, 8)
    else:
        bt = min(batch_tile, _round_up(pl.cdiv(B, 2), 16))
        bt = max(64, min(bt, _round_up(B, 8)))
    n_steps = pl.cdiv(B, bt)

    x_dtype = x.dtype
    w_dtype = prepared["w1"].dtype
    isz_x = jnp.dtype(x_dtype).itemsize
    isz_w = jnp.dtype(w_dtype).itemsize

    # VMEM budget: single-buffered resident weights/biases + streamed x/out
    # tiles + in-kernel activation temporaries (f32 h plus its w_dtype cast
    # copy feeding the next matmul) + headroom.
    weight_bytes = (in_dim * h1_p + h1_p * h2_p + h2_p * lat_p
                    + (h1_p + h2_p + lat_p)) * isz_w
    x_buffers = 3 if n_steps >= 3 else 2
    stream_bytes = x_buffers * bt * in_dim * isz_x + 2 * bt * lat_p * isz_x
    act_bytes = bt * (h1_p + h2_p) * (4 + isz_w)
    vmem_need = weight_bytes + stream_bytes + act_bytes + (2 << 20)

    try:
        vmem_cap = pltpu.get_tpu_info().vmem_capacity_bytes
    except Exception:
        vmem_cap = 64 << 20  # conservative (v7x per-TC VMEM)
    vmem_limit = int(min(max(vmem_need, 16 << 20), int(0.85 * vmem_cap)))

    flops = 2 * B * (in_dim * h1_p + h1_p * h2_p + h2_p * lat_p)
    bytes_accessed = (B * in_dim + B * lat_p) * isz_x + weight_bytes

    kern = functools.partial(_mlp_kernel, h1_p=h1_p, h2_p=h2_p)

    # Resident operands: block index never changes -> single buffer.
    resident = lambda shape: pl.BlockSpec(
        shape, lambda i: (0, 0), pipeline_mode=pl.Buffered(1))

    if n_steps >= 3:
        x_spec = pl.BlockSpec((bt, in_dim), lambda i: (i, 0),
                              pipeline_mode=pl.Buffered(3))
    else:
        x_spec = pl.BlockSpec((bt, in_dim), lambda i: (i, 0))

    out = pl.pallas_call(
        kern,
        out_shape=jax.ShapeDtypeStruct((B, lat_p), x_dtype),
        grid_spec=pltpu.PrefetchScalarGridSpec(
            num_scalar_prefetch=0,
            grid=(n_steps,),
            in_specs=[
                x_spec,                                   # x batch tile
                resident((in_dim, h1_p)),                 # w1
                resident((1, h1_p + h2_p + lat_p)),       # b1|b2|b3
                resident((h1_p, h2_p)),                   # w2
                resident((h2_p, lat_p)),                  # w3
            ],
            out_specs=pl.BlockSpec((bt, lat_p), lambda i: (i, 0)),
        ),
        compiler_params=pltpu.CompilerParams(
            dimension_semantics=("parallel",),
            vmem_limit_bytes=vmem_limit,
        ),
        cost_estimate=pl.CostEstimate(
            flops=flops, transcendentals=0, bytes_accessed=bytes_accessed),
    )(x, prepared["w1"], prepared["b"], prepared["w2"], prepared["w3"])

    # Slice away lane padding on the latent dim (batch dim was never padded).
    return out[:, :latent_dim]


def init_params(key, in_dim, hidden_dims, latent_dim, dtype=jnp.float32):
    """Deterministic PyTorch-style Linear init: U(-1/sqrt(fan_in), 1/sqrt(fan_in))."""
    dims = [in_dim] + list(hidden_dims) + [latent_dim]
    params = {}
    keys = jax.random.split(key, 2 * (len(dims) - 1))
    for li in range(len(dims) - 1):
        fan_in, fan_out = dims[li], dims[li + 1]
        bound = 1.0 / math.sqrt(fan_in)
        w = jax.random.uniform(keys[2 * li], (fan_in, fan_out),
                               minval=-bound, maxval=bound, dtype=dtype)
        b = jax.random.uniform(keys[2 * li + 1], (1, fan_out),
                               minval=-bound, maxval=bound, dtype=dtype)
        params[f"w{li + 1}"] = w
        params[f"b{li + 1}"] = b
    return params


def reference_forward(x, params):
    """Pure-JAX reference of the same MLP for correctness checks."""
    h = jnp.maximum(x @ params["w1"] + params["b1"], 0.0)
    h = jnp.maximum(h @ params["w2"] + params["b2"], 0.0)
    return h @ params["w3"] + params["b3"]


if __name__ == "__main__":
    # Module-consistent small shapes: in_dim=32, hidden_dims=[64, 32], latent_dim=16.
    B, in_dim = 8, 32
    hidden_dims = [64, 32]
    latent_dim = 16

    key = jax.random.PRNGKey(0)
    k_x, k_p = jax.random.split(key)
    x = jax.random.normal(k_x, (B, in_dim), dtype=jnp.float32)
    params = init_params(k_p, in_dim, hidden_dims, latent_dim)
    prepared = prepare_params(params)                      # pad weights ONCE

    # 1) Small f32 batch (single grid step, tile == batch).
    out = jax.block_until_ready(
        svdd_backbone_forward(x, prepared, latent_dim=latent_dim))
    ref = reference_forward(x, params)
    assert out.shape == (B, latent_dim)
    assert out.dtype == x.dtype
    assert jnp.allclose(out, ref, atol=1e-5, rtol=1e-5), "f32 mismatch vs reference"

    # 2) Ragged batch (not a multiple of the tile): exercises the multi-step
    #    grid with a partial trailing block and NO wrapper-side x padding.
    B2 = 200
    x2 = jax.random.normal(jax.random.PRNGKey(1), (B2, in_dim), dtype=jnp.float32)
    out2 = jax.block_until_ready(
        svdd_backbone_forward(x2, prepared, latent_dim=latent_dim, batch_tile=128))
    ref2 = reference_forward(x2, params)
    assert out2.shape == (B2, latent_dim)
    assert jnp.allclose(out2, ref2, atol=1e-5, rtol=1e-5), "ragged f32 mismatch"

    # 3) bf16 fast path: f32 master params cast once in prepare_params; bf16
    #    operands on the MXU with f32 accumulation.
    prepared_bf16 = prepare_params(params, dtype=jnp.bfloat16)
    xb = x2.astype(jnp.bfloat16)
    outb = jax.block_until_ready(
        svdd_backbone_forward(xb, prepared_bf16, latent_dim=latent_dim, batch_tile=128))
    refb = reference_forward(
        xb.astype(jnp.float32),
        {k: v.astype(jnp.bfloat16).astype(jnp.float32) for k, v in params.items()})
    assert outb.shape == (B2, latent_dim)
    assert outb.dtype == jnp.bfloat16
    assert jnp.allclose(outb.astype(jnp.float32), refb, atol=1e-1, rtol=1e-1), \
        "bf16 mismatch vs f32 reference"

    print("KERNEL_OK")
</pallas_src>

<mosaic_0001>
module attributes {stable_mosaic.version = 11 : i64} {
  func.func @_mlp_kernel(%arg0: i32, %arg1: memref<8x32xf32, #tpu.memory_space<vmem>>, %arg2: memref<32x128xf32, #tpu.memory_space<vmem>>, %arg3: memref<1x384xf32, #tpu.memory_space<vmem>>, %arg4: memref<128x128xf32, #tpu.memory_space<vmem>>, %arg5: memref<128x128xf32, #tpu.memory_space<vmem>>, %arg6: memref<8x128xf32, #tpu.memory_space<vmem>>) attributes {dimension_semantics = [#tpu.dimension_semantics<parallel>], iteration_bounds = array<i64: 1>, scalar_prefetch = 0 : i64, scratch_operands = 0 : i64, tpu.core_type = #tpu.core_type<tc>, window_params = [{transform_indices = @transform_0, window_bounds = array<i64: 8, 32>}, {pipeline_mode = #tpu.pipeline_mode<synchronous>, transform_indices = @transform_1, window_bounds = array<i64: 32, 128>}, {pipeline_mode = #tpu.pipeline_mode<synchronous>, transform_indices = @transform_2, window_bounds = array<i64: 1, 384>}, {pipeline_mode = #tpu.pipeline_mode<synchronous>, transform_indices = @transform_3, window_bounds = array<i64: 128, 128>}, {pipeline_mode = #tpu.pipeline_mode<synchronous>, transform_indices = @transform_4, window_bounds = array<i64: 128, 128>}, {transform_indices = @transform_5, window_bounds = array<i64: 8, 128>}]} {
    %c0 = arith.constant 0 : index
    %c0_0 = arith.constant 0 : index
    %0 = vector.load %arg1[%c0, %c0_0] : memref<8x32xf32, #tpu.memory_space<vmem>>, vector<8x32xf32>
    %c0_1 = arith.constant 0 : index
    %c0_2 = arith.constant 0 : index
    %1 = vector.load %arg3[%c0_1, %c0_2] : memref<1x384xf32, #tpu.memory_space<vmem>>, vector<1x128xf32>
    %c0_3 = arith.constant 0 : index
    %c128 = arith.constant 128 : index
    %2 = vector.load %arg3[%c0_3, %c128] : memref<1x384xf32, #tpu.memory_space<vmem>>, vector<1x128xf32>
    %c0_4 = arith.constant 0 : index
    %c256 = arith.constant 256 : index
    %3 = vector.load %arg3[%c0_4, %c256] : memref<1x384xf32, #tpu.memory_space<vmem>>, vector<1x128xf32>
    %c0_5 = arith.constant 0 : index
    %c0_6 = arith.constant 0 : index
    %4 = vector.load %arg2[%c0_5, %c0_6] : memref<32x128xf32, #tpu.memory_space<vmem>>, vector<32x128xf32>
    %cst = arith.constant dense<0.000000e+00> : vector<8x128xf32>
    %5 = tpu.matmul %0, %4, %cst {dimension_numbers = #tpu.dot_dimension_numbers<[1], [0], [0], [1], [0, 0, 1, 1], [], []>} : vector<8x32xf32>, vector<32x128xf32>, vector<8x128xf32> -> vector<8x128xf32>
    %6 = vector.broadcast %1 : vector<1x128xf32> to vector<8x128xf32>
    %7 = arith.addf %5, %6 : vector<8x128xf32>
    %cst_7 = arith.constant 0.000000e+00 : f32
    %8 = vector.broadcast %cst_7 : f32 to vector<8x128xf32>
    %9 = arith.maximumf %7, %8 : vector<8x128xf32>
    %c0_8 = arith.constant 0 : index
    %c0_9 = arith.constant 0 : index
    %10 = vector.load %arg4[%c0_8, %c0_9] : memref<128x128xf32, #tpu.memory_space<vmem>>, vector<128x128xf32>
    %cst_10 = arith.constant dense<0.000000e+00> : vector<8x128xf32>
    %11 = tpu.matmul %9, %10, %cst_10 {dimension_numbers = #tpu.dot_dimension_numbers<[1], [0], [0], [1], [0, 0, 1, 1], [], []>} : vector<8x128xf32>, vector<128x128xf32>, vector<8x128xf32> -> vector<8x128xf32>
    %12 = vector.broadcast %2 : vector<1x128xf32> to vector<8x128xf32>
    %13 = arith.addf %11, %12 : vector<8x128xf32>
    %cst_11 = arith.constant 0.000000e+00 : f32
    %14 = vector.broadcast %cst_11 : f32 to vector<8x128xf32>
    %15 = arith.maximumf %13, %14 : vector<8x128xf32>
    %c0_12 = arith.constant 0 : index
    %c0_13 = arith.constant 0 : index
    %16 = vector.load %arg5[%c0_12, %c0_13] : memref<128x128xf32, #tpu.memory_space<vmem>>, vector<128x128xf32>
    %cst_14 = arith.constant dense<0.000000e+00> : vector<8x128xf32>
    %17 = tpu.matmul %15, %16, %cst_14 {dimension_numbers = #tpu.dot_dimension_numbers<[1], [0], [0], [1], [0, 0, 1, 1], [], []>} : vector<8x128xf32>, vector<128x128xf32>, vector<8x128xf32> -> vector<8x128xf32>
    %18 = vector.broadcast %3 : vector<1x128xf32> to vector<8x128xf32>
    %19 = arith.addf %17, %18 : vector<8x128xf32>
    %c0_15 = arith.constant 0 : index
    %c0_16 = arith.constant 0 : index
    %20 = vector.load %arg6[%c0_15, %c0_16] : memref<8x128xf32, #tpu.memory_space<vmem>>, vector<8x128xf32>
    tpu.vector_store %arg6[%c0_15, %c0_16], %19 {strides = array<i32>} : memref<8x128xf32, #tpu.memory_space<vmem>>, vector<8x128xf32>,
    return
  }
  func.func @transform_0(%arg0: i32) -> (i32, i32) {
    %c0_i32 = arith.constant 0 : i32
    %c0_i32_0 = arith.constant 0 : i32
    return %arg0, %c0_i32 : i32, i32
  }
  func.func @transform_1(%arg0: i32) -> (i32, i32) {
    %c0_i32 = arith.constant 0 : i32
    %c0_i32_0 = arith.constant 0 : i32
    %c0_i32_1 = arith.constant 0 : i32
    return %c0_i32, %c0_i32_0 : i32, i32
  }
  func.func @transform_2(%arg0: i32) -> (i32, i32) {
    %c0_i32 = arith.constant 0 : i32
    %c0_i32_0 = arith.constant 0 : i32
    %c0_i32_1 = arith.constant 0 : i32
    return %c0_i32, %c0_i32_0 : i32, i32
  }
  func.func @transform_3(%arg0: i32) -> (i32, i32) {
    %c0_i32 = arith.constant 0 : i32
    %c0_i32_0 = arith.constant 0 : i32
    %c0_i32_1 = arith.constant 0 : i32
    return %c0_i32, %c0_i32_0 : i32, i32
  }
  func.func @transform_4(%arg0: i32) -> (i32, i32) {
    %c0_i32 = arith.constant 0 : i32
    %c0_i32_0 = arith.constant 0 : i32
    %c0_i32_1 = arith.constant 0 : i32
    return %c0_i32, %c0_i32_0 : i32, i32
  }
  func.func @transform_5(%arg0: i32) -> (i32, i32) {
    %c0_i32 = arith.constant 0 : i32
    %c0_i32_0 = arith.constant 0 : i32
    return %arg0, %c0_i32 : i32, i32
  }
}

</mosaic_0001>

<llo_original>
// kernel: svdd_backbone_forward.1
$region0: #{svdd_backbone_forward.1}
  #allocation0 [shape = 'u32[]', space=smem, size = 0x4, offset = 0x4, fixed_abs, tag = 'smem constant byte address 0x4 - core index']
  #allocation1 [shape = 'u32[72,128]{1,0:T(1,128)}', space=vmem, size = 0x9000, scoped, tag = 'internal scratch']
  %s0 = inlined_call_operand.hbm [shape: f32[8,32], index: 0, kind: input, shape index: {}]
  %s1 = inlined_call_operand.hbm [shape: f32[32,128], index: 1, kind: input, shape index: {}]
  %s2 = inlined_call_operand.hbm [shape: f32[1,384], index: 2, kind: input, shape index: {}]
  %s3 = inlined_call_operand.hbm [shape: f32[128,128], index: 3, kind: input, shape index: {}]
  %s4 = inlined_call_operand.hbm [shape: f32[128,128], index: 4, kind: input, shape index: {}]
  %s5 = inlined_call_operand.hbm [shape: f32[8,128], index: 5, kind: output, shape index: {}]
  %s6 = sld [smem:[#allocation0]]
  $region50: #{svdd_backbone_forward.1} parent=0
    _
  %s8 = ssub.s32 1, %s6
  %s9 = scalar_select 0, %s8, %s6
  $region1: #{svdd_backbone_forward.1} parent=0
    #allocation2 [shape = 'u8[4096]{0}', space=vmem, size = 0x1000, scoped, tag = 'input window, operand 0, single buffered']
    #allocation3 [shape = 's32[1]{0}', space=sflag, size = 0x4, scoped, tag = 'scoped memory for svdd_backbone_forward.1']
    #allocation4 [shape = 's32[1]{0}', space=sflag, size = 0x4, scoped, tag = 'scoped memory for svdd_backbone_forward.1']
    #allocation5 [shape = 'u8[16384]{0}', space=vmem, size = 0x4000, scoped, tag = 'input window, operand 1, single buffered']
    #allocation6 [shape = 's32[1]{0}', space=sflag, size = 0x4, scoped, tag = 'scoped memory for svdd_backbone_forward.1']
    #allocation7 [shape = 'u8[1536]{0}', space=vmem, size = 0x800, scoped, tag = 'input window, operand 2, single buffered']
    #allocation8 [shape = 'u8[65536]{0}', space=vmem, size = 0x10000, scoped, tag = 'input window, operand 3, single buffered']
    #allocation9 [shape = 's32[1]{0}', space=sflag, size = 0x4, scoped, tag = 'scoped memory for svdd_backbone_forward.1']
    #allocation10 [shape = 'u8[65536]{0}', space=vmem, size = 0x10000, scoped, tag = 'input window, operand 4, single buffered']
    #allocation11 [shape = 'u8[4096]{0}', space=vmem, size = 0x1000, scoped, tag = 'output window, operand 0, single buffered']
    %10 = vsyncpa [#allocation3], 0
    %11 = vsyncpa [#allocation6], 0
    %12 = vsyncpa [#allocation9], 0
    %13 = vsyncpa [#allocation4], 0
    // Predicated region
    $region2: #{svdd_backbone_forward.1} parent=1 // pred_check
      _
    $region3: #{svdd_backbone_forward.1} parent=1 // pred_check_branch
      %15 = sbr.rel (0) target = $region5
    $region4: #{svdd_backbone_forward.1} parent=1 // pred_region
      %17 = vsyncadd [#allocation3], 0
      %s19 = sshll.u32 %s0, 4
      %s20 = int_to_ptr.hbm [resolvable:$true] %s19
      %s21 = sshll.u32 [#allocation2], 4
      %s22 = int_to_ptr.vmem [resolvable:$true] %s21
      %24 = dma.hbm_to_vmem [thread:$0]  %s20, 128, %s22, [#allocation3]
    $region5: #{svdd_backbone_forward.1} parent=1 // pred_fallthru
      _
    // Predicated region
    $region6: #{svdd_backbone_forward.1} parent=1 // pred_check
      _
    $region7: #{svdd_backbone_forward.1} parent=1 // pred_check_branch
      %26 = sbr.rel (0) target = $region9
    $region8: #{svdd_backbone_forward.1} parent=1 // pred_region
      %28 = vsyncadd [#allocation6], 0
      %s29 = sshll.u32 %s1, 4
      %s30 = int_to_ptr.hbm [resolvable:$true] %s29
      %s31 = sshll.u32 [#allocation5], 4
      %s32 = int_to_ptr.vmem [resolvable:$true] %s31
      %37 = dma.hbm_to_vmem [thread:$0]  %s30, 512, %s32, [#allocation6], 128, 128, 8
    $region9: #{svdd_backbone_forward.1} parent=1 // pred_fallthru
      _
    // Predicated region
    $region10: #{svdd_backbone_forward.1} parent=1 // pred_check
      _
    $region11: #{svdd_backbone_forward.1} parent=1 // pred_check_branch
      %39 = sbr.rel (0) target = $region13
    $region12: #{svdd_backbone_forward.1} parent=1 // pred_region
      %41 = vsyncadd [#allocation6], 0
      %s43 = sshll.u32 %s2, 4
      %s44 = int_to_ptr.hbm [resolvable:$true] %s43
      %s45 = sshll.u32 [#allocation7], 4
      %s46 = int_to_ptr.vmem [resolvable:$true] %s45
      %48 = dma.hbm_to_vmem [thread:$0]  %s44, 48, %s46, [#allocation6]
    $region13: #{svdd_backbone_forward.1} parent=1 // pred_fallthru
      _
    // Predicated region
    $region14: #{svdd_backbone_forward.1} parent=1 // pred_check
      _
    $region15: #{svdd_backbone_forward.1} parent=1 // pred_check_branch
      %50 = sbr.rel (0) target = $region17
    $region16: #{svdd_backbone_forward.1} parent=1 // pred_region
      %52 = vsyncadd [#allocation9], 0
      %s53 = sshll.u32 %s3, 4
      %s54 = int_to_ptr.hbm [resolvable:$true] %s53
      %s55 = sshll.u32 [#allocation8], 4
      %s56 = int_to_ptr.vmem [resolvable:$true] %s55
      %61 = dma.hbm_to_vmem [thread:$0]  %s54, 2048, %s56, [#allocation9], 128, 128, 8
    $region17: #{svdd_backbone_forward.1} parent=1 // pred_fallthru
      _
    // Predicated region
    $region18: #{svdd_backbone_forward.1} parent=1 // pred_check
      _
    $region19: #{svdd_backbone_forward.1} parent=1 // pred_check_branch
      %63 = sbr.rel (0) target = $region21
    $region20: #{svdd_backbone_forward.1} parent=1 // pred_region
      %65 = vsyncadd [#allocation9], 0
      %s66 = sshll.u32 %s4, 4
      %s67 = int_to_ptr.hbm [resolvable:$true] %s66
      %s68 = sshll.u32 [#allocation10], 4
      %s69 = int_to_ptr.vmem [resolvable:$true] %s68
      %74 = dma.hbm_to_vmem [thread:$0]  %s67, 2048, %s69, [#allocation9], 128, 128, 8
    $region21: #{svdd_backbone_forward.1} parent=1 // pred_fallthru
      _
    // Predicated region
    $region22: #{svdd_backbone_forward.1} parent=1 // pred_check
      _
    $region23: #{svdd_backbone_forward.1} parent=1 // pred_check_branch
      %76 = sbr.rel (0) target = $region25
    $region24: #{svdd_backbone_forward.1} parent=1 // pred_region
      %78 = dma.done [#allocation3], 128
    $region25: #{svdd_backbone_forward.1} parent=1 // pred_fallthru
      _
    // Predicated region
    $region26: #{svdd_backbone_forward.1} parent=1 // pred_check
      _
    $region27: #{svdd_backbone_forward.1} parent=1 // pred_check_branch
      %80 = sbr.rel (0) target = $region29
    $region28: #{svdd_backbone_forward.1} parent=1 // pred_region
      %82 = dma.done [#allocation6], 512
    $region29: #{svdd_backbone_forward.1} parent=1 // pred_fallthru
      _
    // Predicated region
    $region30: #{svdd_backbone_forward.1} parent=1 // pred_check
      _
    $region31: #{svdd_backbone_forward.1} parent=1 // pred_check_branch
      %84 = sbr.rel (0) target = $region33
    $region32: #{svdd_backbone_forward.1} parent=1 // pred_region
      %86 = dma.done [#allocation6], 48
    $region33: #{svdd_backbone_forward.1} parent=1 // pred_fallthru
      _
    // Predicated region
    $region34: #{svdd_backbone_forward.1} parent=1 // pred_check
      _
    $region35: #{svdd_backbone_forward.1} parent=1 // pred_check_branch
      %88 = sbr.rel (0) target = $region37
    $region36: #{svdd_backbone_forward.1} parent=1 // pred_region
      %90 = dma.done [#allocation9], 2048
    $region37: #{svdd_backbone_forward.1} parent=1 // pred_fallthru
      _
    // Predicated region
    $region38: #{svdd_backbone_forward.1} parent=1 // pred_check
      _
    $region39: #{svdd_backbone_forward.1} parent=1 // pred_check_branch
      %92 = sbr.rel (0) target = $region41
    $region40: #{svdd_backbone_forward.1} parent=1 // pred_region
      %94 = dma.done [#allocation9], 2048
    $region41: #{svdd_backbone_forward.1} parent=1 // pred_fallthru
      _
    %v95 = vld [vmem:[#allocation2] sm:$0xff]
    %v96 = vld [vmem:[#allocation7] sm:$0x1]
    %v97 = vld [vmem:[#allocation7 + $0x1] sm:$0x1]
    %v98 = vld [vmem:[#allocation7 + $0x2] sm:$0x1]
    %v99 = vld [vmem:[#allocation5] sm:$0xff]
    %v100 = vld [vmem:[#allocation5 + $0x8] sm:$0xff]
    %v101 = vld [vmem:[#allocation5 + $0x10] sm:$0xff]
    %v102 = vld [vmem:[#allocation5 + $0x18] sm:$0xff]
    %v104 = vperm.slane %v96, 0
    %vm106 = vcmask 261120
    %v108 = vsel %vm106, %v95, 0
    %110 = vmatpush.msra.mxu0 0.0
    %111 = vmatpush.msra.mxu0 0.0
    %112 = vmatpush.msra.mxu0 0.0
    %113 = vmatpush.msra.mxu0 0.0
    %114 = vmatpush.msra.mxu0 0.0
    %115 = vmatpush.msra.mxu0 0.0
    %116 = vmatpush.msra.mxu0 0.0
    %117 = vmatpush.msra.mxu0 0.0
    %118 = vmatpush.msra.mxu0 0.0
    %119 = vmatpush.msra.mxu0 0.0
    %120 = vmatpush.msra.mxu0 0.0
    %121 = vmatpush.msra.mxu0 0.0
    %122 = vmatpush.msra.mxu0 %v102
    %123 = vmatpush.msra.mxu0 %v101
    %124 = vmatpush.msra.mxu0 %v100
    %125 = vmatpush.msra.mxu0 %v99
    %126 = vmatmul.f32.gmra.mxu0 %v108
    %v127 = vpop.f32.mrf.mxu0
    %v128 = vadd.f32 %v104, %v127
    %129 = vdwg.mxu0
    %v130 = vmax.f32 %v128, 0.0
    %v131 = vld [vmem:[#allocation8] sm:$0xff]
    %v132 = vld [vmem:[#allocation8 + $0x8] sm:$0xff]
    %v133 = vld [vmem:[#allocation8 + $0x10] sm:$0xff]
    %v134 = vld [vmem:[#allocation8 + $0x18] sm:$0xff]
    %v135 = vld [vmem:[#allocation8 + $0x20] sm:$0xff]
    %v136 = vld [vmem:[#allocation8 + $0x28] sm:$0xff]
    %v137 = vld [vmem:[#allocation8 + $0x30] sm:$0xff]
    %v138 = vld [vmem:[#allocation8 + $0x38] sm:$0xff]
    %v139 = vld [vmem:[#allocation8 + $0x40] sm:$0xff]
    %v140 = vld [vmem:[#allocation8 + $0x48] sm:$0xff]
    %v141 = vld [vmem:[#allocation8 + $0x50] sm:$0xff]
    %v142 = vld [vmem:[#allocation8 + $0x58] sm:$0xff]
    %v143 = vld [vmem:[#allocation8 + $0x60] sm:$0xff]
    %v144 = vld [vmem:[#allocation8 + $0x68] sm:$0xff]
    %v145 = vld [vmem:[#allocation8 + $0x70] sm:$0xff]
    %v146 = vld [vmem:[#allocation8 + $0x78] sm:$0xff]
    %v148 = vperm.slane %v97, 0
    %150 = vmatpush.msra.mxu0 %v146
    %151 = vmatpush.msra.mxu0 %v145
    %152 = vmatpush.msra.mxu0 %v144
    %153 = vmatpush.msra.mxu0 %v143
    %154 = vmatpush.msra.mxu0 %v142
    %155 = vmatpush.msra.mxu0 %v141
    %156 = vmatpush.msra.mxu0 %v140
    %157 = vmatpush.msra.mxu0 %v139
    %158 = vmatpush.msra.mxu0 %v138
    %159 = vmatpush.msra.mxu0 %v137
    %160 = vmatpush.msra.mxu0 %v136
    %161 = vmatpush.msra.mxu0 %v135
    %162 = vmatpush.msra.mxu0 %v134
    %163 = vmatpush.msra.mxu0 %v133
    %164 = vmatpush.msra.mxu0 %v132
    %165 = vmatpush.msra.mxu0 %v131
    %166 = vmatmul.f32.gmra.mxu0 %v130
    %v167 = vpop.f32.mrf.mxu0
    %v168 = vadd.f32 %v148, %v167
    %169 = vdwg.mxu0
    %v170 = vmax.f32 %v168, 0.0
    %v171 = vld [vmem:[#allocation10] sm:$0xff]
    %v172 = vld [vmem:[#allocation10 + $0x8] sm:$0xff]
    %v173 = vld [vmem:[#allocation10 + $0x10] sm:$0xff]
    %v174 = vld [vmem:[#allocation10 + $0x18] sm:$0xff]
    %v175 = vld [vmem:[#allocation10 + $0x20] sm:$0xff]
    %v176 = vld [vmem:[#allocation10 + $0x28] sm:$0xff]
    %v177 = vld [vmem:[#allocation10 + $0x30] sm:$0xff]
    %v178 = vld [vmem:[#allocation10 + $0x38] sm:$0xff]
    %v179 = vld [vmem:[#allocation10 + $0x40] sm:$0xff]
    %v180 = vld [vmem:[#allocation10 + $0x48] sm:$0xff]
    %v181 = vld [vmem:[#allocation10 + $0x50] sm:$0xff]
    %v182 = vld [vmem:[#allocation10 + $0x58] sm:$0xff]
    %v183 = vld [vmem:[#allocation10 + $0x60] sm:$0xff]
    %v184 = vld [vmem:[#allocation10 + $0x68] sm:$0xff]
    %v185 = vld [vmem:[#allocation10 + $0x70] sm:$0xff]
    %v186 = vld [vmem:[#allocation10 + $0x78] sm:$0xff]
    %v188 = vperm.slane %v98, 0
    %190 = vmatpush.msra.mxu0 %v186
    %191 = vmatpush.msra.mxu0 %v185
    %192 = vmatpush.msra.mxu0 %v184
    %193 = vmatpush.msra.mxu0 %v183
    %194 = vmatpush.msra.mxu0 %v182
    %195 = vmatpush.msra.mxu0 %v181
    %196 = vmatpush.msra.mxu0 %v180
    %197 = vmatpush.msra.mxu0 %v179
    %198 = vmatpush.msra.mxu0 %v178
    %199 = vmatpush.msra.mxu0 %v177
    %200 = vmatpush.msra.mxu0 %v176
    %201 = vmatpush.msra.mxu0 %v175
    %202 = vmatpush.msra.mxu0 %v174
    %203 = vmatpush.msra.mxu0 %v173
    %204 = vmatpush.msra.mxu0 %v172
    %205 = vmatpush.msra.mxu0 %v171
    %206 = vmatmul.f32.gmra.mxu0 %v170
    %v207 = vpop.f32.mrf.mxu0
    %v208 = vadd.f32 %v188, %v207
    %209 = vdwg.mxu0
    %210 = vst [vmem:[#allocation11] sm:$0xff] %v208
    // Predicated region
    $region42: #{svdd_backbone_forward.1} parent=1 // pred_check
      _
    $region43: #{svdd_backbone_forward.1} parent=1 // pred_check_branch
      %212 = sbr.rel (0) target = $region45
    $region44: #{svdd_backbone_forward.1} parent=1 // pred_region
      %214 = vsyncadd [#allocation4], 0
      %s216 = sshll.u32 [#allocation11], 4
      %s217 = int_to_ptr.vmem [resolvable:$true] %s216
      %s218 = sshll.u32 %s5, 4
      %s219 = int_to_ptr.hbm [resolvable:$true] %s218
      %221 = dma.vmem_to_hbm [thread:$0]  %s217, 128, %s219, [#allocation4]
    $region45: #{svdd_backbone_forward.1} parent=1 // pred_fallthru
      _
    // Predicated region
    $region46: #{svdd_backbone_forward.1} parent=1 // pred_check
      _
    $region47: #{svdd_backbone_forward.1} parent=1 // pred_check_branch
      %223 = sbr.rel (0) target = $region49
    $region48: #{svdd_backbone_forward.1} parent=1 // pred_region
      %225 = dma.done [#allocation4], 128
    $region49: #{svdd_backbone_forward.1} parent=1 // pred_fallthru
      _
    %226 = vsyncpa [#allocation3], 1
    %227 = vsyncpa [#allocation6], 1
    %228 = vsyncpa [#allocation9], 1
    %229 = vsyncpa [#allocation4], 1

</llo_original>
